<compile_context>
chip_gen: v6e
topology: v6e:2x2x1
jax: 0.10.0
libtpu: 0.0.40
codegen_flags: <defaults>
</compile_context>

<pallas_src>
import jax
import jax.numpy as jnp
from jax.experimental import pallas as pl
from jax.experimental.pallas import tpu as pltpu

BN_EPS = 1e-5
LANE = 128


def _round_up(n, m):
    return ((n + m - 1) // m) * m


def fasttext_kernel(x_ref, w1_ref, b1_ref, gamma_ref, beta_ref, w2_ref, b2_ref,
                    out_ref):
    # ---- sequence pooling --------------------------------------------------
    # mean over dim=1 is realized as sum; the 1/S factor is folded into W1
    # at trace time in the wrapper.
    pooled = jnp.sum(x_ref[...], axis=1)                         # (B, D)

    # ---- Linear(vec_dim -> hidden): pooled @ W1p + b1 ----------------------
    # W1p is already (D, Hp): contraction over last/first axes, no transpose.
    h = jnp.dot(pooled, w1_ref[...],
                preferred_element_type=jnp.float32) + b1_ref[...]  # (B, Hp)

    # ---- BatchNorm1d(hidden), training mode (biased batch statistics) -----
    mu = jnp.mean(h, axis=0, keepdims=True)                      # (1, Hp)
    diff = h - mu
    var = jnp.mean(diff * diff, axis=0, keepdims=True)           # (1, Hp)
    inv_std = jax.lax.rsqrt(var + BN_EPS)
    hn = diff * inv_std * gamma_ref[...] + beta_ref[...]

    # ---- ReLU --------------------------------------------------------------
    r = jnp.maximum(hn, 0.0)

    # ---- Linear(hidden -> label): r @ W2p + b2 -----------------------------
    # W2p is already (Hp, Lp); output is a full lane-dense (B, Lp) store.
    out_ref[...] = (jnp.dot(r, w2_ref[...],
                            preferred_element_type=jnp.float32)
                    + b2_ref[...]).astype(out_ref.dtype)


def fasttext_forward(x, w1, b1, gamma, beta, w2, b2):
    """x: (B, S, D) f32; w1: (H, D); w2: (L, H). Returns (B, L) f32."""
    B, S, D = x.shape
    H = w1.shape[0]
    L = w2.shape[0]
    Hp = _round_up(H, LANE)
    Lp = _round_up(L, LANE)
    f32 = jnp.float32

    # Trace-time (outside-kernel, effectively free) weight prep:
    #  - transpose to contraction-friendly layouts (D,H) and (H,L)
    #  - fold the 1/S of the sequence mean into W1
    #  - zero-pad H and L up to lane-dense multiples of 128
    w1_t = w1.astype(f32).T / f32(S)                              # (D, H)
    w1_p = jnp.zeros((D, Hp), f32).at[:, :H].set(w1_t)
    b1_p = jnp.zeros((1, Hp), f32).at[0, :H].set(b1.astype(f32))
    gamma_p = jnp.ones((1, Hp), f32).at[0, :H].set(gamma.astype(f32))
    beta_p = jnp.zeros((1, Hp), f32).at[0, :H].set(beta.astype(f32))
    w2_p = jnp.zeros((Hp, Lp), f32).at[:H, :L].set(w2.astype(f32).T)
    b2_p = jnp.zeros((1, Lp), f32).at[0, :L].set(b2.astype(f32))
    # Padded hidden channels stay exactly 0 through BN/ReLU (zero mean/var,
    # beta=0) and the padded W2 rows/cols are zero, so padding never leaks
    # into the real [:, :L] outputs.

    # TODO(synk): if B is ever tiled over a grid axis for large batches,
    # training-mode BatchNorm statistics couple all B-tiles; keep B un-tiled
    # per kernel invocation (or switch to a two-phase stats/normalize design).
    vmem_spec = pl.BlockSpec(memory_space=pltpu.MemorySpace.VMEM)

    out_p = pl.pallas_call(
        fasttext_kernel,
        out_shape=jax.ShapeDtypeStruct((B, Lp), f32),
        in_specs=[vmem_spec] * 7,
        out_specs=vmem_spec,
    )(x.astype(f32), w1_p, b1_p, gamma_p, beta_p, w2_p, b2_p)

    return out_p[:, :L]


if __name__ == "__main__":
    # Small, deterministic shapes consistent with the module's forward:
    #   x: (batch, seq, vec_dim); fc: vec_dim -> hidden -> label
    B, S, D, H, L = 8, 8, 32, 32, 8

    key = jax.random.PRNGKey(0)
    kx, kw1, kb1, kw2, kb2 = jax.random.split(key, 5)

    x = jax.random.normal(kx, (B, S, D), dtype=jnp.float32)

    # Deterministic parameter init (synthetic; no checkpoint load).
    w1 = jax.random.normal(kw1, (H, D), dtype=jnp.float32) * 0.1
    b1 = jax.random.normal(kb1, (H,), dtype=jnp.float32) * 0.1
    gamma = jnp.ones((H,), dtype=jnp.float32)     # BatchNorm1d weight init
    beta = jnp.zeros((H,), dtype=jnp.float32)     # BatchNorm1d bias init
    w2 = jax.random.normal(kw2, (L, H), dtype=jnp.float32) * 0.1
    b2 = jax.random.normal(kb2, (L,), dtype=jnp.float32) * 0.1

    out = fasttext_forward(x, w1, b1, gamma, beta, w2, b2)
    jax.block_until_ready(out)

    # Pure-JAX reference (training-mode BatchNorm, batch statistics).
    pooled = jnp.mean(x, axis=1)
    h = pooled @ w1.T + b1
    mu = jnp.mean(h, axis=0)
    var = jnp.mean((h - mu) ** 2, axis=0)
    hn = (h - mu) / jnp.sqrt(var + BN_EPS) * gamma + beta
    ref = jnp.maximum(hn, 0.0) @ w2.T + b2

    assert out.shape == (B, L)
    assert jnp.allclose(out, ref, atol=1e-4, rtol=1e-4)
    print("KERNEL_OK")
</pallas_src>

<mosaic_0001>
module attributes {stable_mosaic.version = 11 : i64} {
  func.func @fasttext_kernel(%arg0: memref<8x8x32xf32, #tpu.memory_space<vmem>>, %arg1: memref<32x128xf32, #tpu.memory_space<vmem>>, %arg2: memref<1x128xf32, #tpu.memory_space<vmem>>, %arg3: memref<1x128xf32, #tpu.memory_space<vmem>>, %arg4: memref<1x128xf32, #tpu.memory_space<vmem>>, %arg5: memref<128x128xf32, #tpu.memory_space<vmem>>, %arg6: memref<1x128xf32, #tpu.memory_space<vmem>>, %arg7: memref<8x128xf32, #tpu.memory_space<vmem>>) attributes {dimension_semantics = [], scalar_prefetch = 0 : i64, scratch_operands = 0 : i64, tpu.core_type = #tpu.core_type<tc>} {
    %c0 = arith.constant 0 : index
    %c0_0 = arith.constant 0 : index
    %c0_1 = arith.constant 0 : index
    %0 = vector.load %arg0[%c0, %c0_0, %c0_1] : memref<8x8x32xf32, #tpu.memory_space<vmem>>, vector<8x8x32xf32>
    %cst = arith.constant dense<0.000000e+00> : vector<8x32xf32>
    %1 = vector.multi_reduction <add>, %0, %cst [1] : vector<8x8x32xf32> to vector<8x32xf32>
    %c0_2 = arith.constant 0 : index
    %c0_3 = arith.constant 0 : index
    %2 = vector.load %arg1[%c0_2, %c0_3] : memref<32x128xf32, #tpu.memory_space<vmem>>, vector<32x128xf32>
    %cst_4 = arith.constant dense<0.000000e+00> : vector<8x128xf32>
    %3 = tpu.matmul %1, %2, %cst_4 {dimension_numbers = #tpu.dot_dimension_numbers<[1], [0], [0], [1], [0, 0, 1, 1], [], []>} : vector<8x32xf32>, vector<32x128xf32>, vector<8x128xf32> -> vector<8x128xf32>
    %c0_5 = arith.constant 0 : index
    %c0_6 = arith.constant 0 : index
    %4 = vector.load %arg2[%c0_5, %c0_6] : memref<1x128xf32, #tpu.memory_space<vmem>>, vector<1x128xf32>
    %5 = vector.broadcast %4 : vector<1x128xf32> to vector<8x128xf32>
    %6 = arith.addf %3, %5 : vector<8x128xf32>
    %cst_7 = arith.constant dense<0.000000e+00> : vector<128xf32>
    %7 = vector.multi_reduction <add>, %6, %cst_7 [0] : vector<8x128xf32> to vector<128xf32>
    %8 = vector.shape_cast %7 : vector<128xf32> to vector<1x128xf32>
    %cst_8 = arith.constant 8.000000e+00 : f32
    %9 = vector.broadcast %cst_8 : f32 to vector<1x128xf32>
    %10 = arith.divf %8, %9 : vector<1x128xf32>
    %11 = vector.broadcast %10 : vector<1x128xf32> to vector<8x128xf32>
    %12 = arith.subf %6, %11 : vector<8x128xf32>
    %13 = arith.mulf %12, %12 : vector<8x128xf32>
    %cst_9 = arith.constant dense<0.000000e+00> : vector<128xf32>
    %14 = vector.multi_reduction <add>, %13, %cst_9 [0] : vector<8x128xf32> to vector<128xf32>
    %15 = vector.shape_cast %14 : vector<128xf32> to vector<1x128xf32>
    %cst_10 = arith.constant 8.000000e+00 : f32
    %16 = vector.broadcast %cst_10 : f32 to vector<1x128xf32>
    %17 = arith.divf %15, %16 : vector<1x128xf32>
    %cst_11 = arith.constant 9.99999974E-6 : f32
    %18 = vector.broadcast %cst_11 : f32 to vector<1x128xf32>
    %19 = arith.addf %17, %18 : vector<1x128xf32>
    %20 = math.rsqrt %19 : vector<1x128xf32>
    %21 = vector.broadcast %20 : vector<1x128xf32> to vector<8x128xf32>
    %22 = arith.mulf %12, %21 : vector<8x128xf32>
    %c0_12 = arith.constant 0 : index
    %c0_13 = arith.constant 0 : index
    %23 = vector.load %arg3[%c0_12, %c0_13] : memref<1x128xf32, #tpu.memory_space<vmem>>, vector<1x128xf32>
    %24 = vector.broadcast %23 : vector<1x128xf32> to vector<8x128xf32>
    %25 = arith.mulf %22, %24 : vector<8x128xf32>
    %c0_14 = arith.constant 0 : index
    %c0_15 = arith.constant 0 : index
    %26 = vector.load %arg4[%c0_14, %c0_15] : memref<1x128xf32, #tpu.memory_space<vmem>>, vector<1x128xf32>
    %27 = vector.broadcast %26 : vector<1x128xf32> to vector<8x128xf32>
    %28 = arith.addf %25, %27 : vector<8x128xf32>
    %cst_16 = arith.constant 0.000000e+00 : f32
    %29 = vector.broadcast %cst_16 : f32 to vector<8x128xf32>
    %30 = arith.maximumf %28, %29 : vector<8x128xf32>
    %c0_17 = arith.constant 0 : index
    %c0_18 = arith.constant 0 : index
    %31 = vector.load %arg5[%c0_17, %c0_18] : memref<128x128xf32, #tpu.memory_space<vmem>>, vector<128x128xf32>
    %cst_19 = arith.constant dense<0.000000e+00> : vector<8x128xf32>
    %32 = tpu.matmul %30, %31, %cst_19 {dimension_numbers = #tpu.dot_dimension_numbers<[1], [0], [0], [1], [0, 0, 1, 1], [], []>} : vector<8x128xf32>, vector<128x128xf32>, vector<8x128xf32> -> vector<8x128xf32>
    %c0_20 = arith.constant 0 : index
    %c0_21 = arith.constant 0 : index
    %33 = vector.load %arg6[%c0_20, %c0_21] : memref<1x128xf32, #tpu.memory_space<vmem>>, vector<1x128xf32>
    %34 = vector.broadcast %33 : vector<1x128xf32> to vector<8x128xf32>
    %35 = arith.addf %32, %34 : vector<8x128xf32>
    %c0_22 = arith.constant 0 : index
    %c0_23 = arith.constant 0 : index
    %36 = vector.load %arg7[%c0_22, %c0_23] : memref<8x128xf32, #tpu.memory_space<vmem>>, vector<8x128xf32>
    tpu.vector_store %arg7[%c0_22, %c0_23], %35 {strides = array<i32>} : memref<8x128xf32, #tpu.memory_space<vmem>>, vector<8x128xf32>,
    return
  }
}

</mosaic_0001>

<llo_original>
// kernel: tpu_custom_call.1
$region0: #{tpu_custom_call.1}
  #allocation0 [shape = 'u32[]', space=smem, size = 0x4, offset = 0x4, fixed_abs, tag = 'smem constant byte address 0x4 - core index']
  #allocation1 [shape = 'u32[144,128]{1,0:T(1,128)}', space=vmem, size = 0x12000, scoped, tag = 'internal scratch']
  %s0 = inlined_call_operand.hbm [shape: f32[8,8,32], index: 0, kind: input, shape index: {}]
  %s1 = inlined_call_operand.hbm [shape: f32[32,128], index: 1, kind: input, shape index: {}]
  %s2 = inlined_call_operand.vmem [shape: f32[1,128], index: 2, kind: input, shape index: {}]
  %s3 = inlined_call_operand.vmem [shape: f32[1,128], index: 3, kind: input, shape index: {}]
  %s4 = inlined_call_operand.vmem [shape: f32[1,128], index: 4, kind: input, shape index: {}]
  %s5 = inlined_call_operand.hbm [shape: f32[128,128], index: 5, kind: input, shape index: {}]
  %s6 = inlined_call_operand.vmem [shape: f32[1,128], index: 6, kind: input, shape index: {}]
  %s7 = inlined_call_operand.hbm [shape: f32[8,128], index: 7, kind: output, shape index: {}]
  %s8 = sld [smem:[#allocation0]]
  $region50: #{tpu_custom_call.1} parent=0
    _
  %s10 = ssub.s32 1, %s8
  %s11 = scalar_select 0, %s10, %s8
  $region1: #{tpu_custom_call.1} parent=0
    #allocation2 [shape = 'u8[32768]{0}', space=vmem, size = 0x8000, scoped, tag = 'input window, operand 0, single buffered']
    #allocation3 [shape = 's32[1]{0}', space=sflag, size = 0x4, scoped, tag = 'scoped memory for tpu_custom_call.1']
    #allocation4 [shape = 's32[1]{0}', space=sflag, size = 0x4, scoped, tag = 'scoped memory for tpu_custom_call.1']
    #allocation5 [shape = 'u8[16384]{0}', space=vmem, size = 0x4000, scoped, tag = 'input window, operand 1, single buffered']
    #allocation6 [shape = 's32[1]{0}', space=sflag, size = 0x4, scoped, tag = 'scoped memory for tpu_custom_call.1']
    #allocation7 [shape = 'u8[65536]{0}', space=vmem, size = 0x10000, scoped, tag = 'input window, operand 5, single buffered']
    #allocation8 [shape = 'u8[4096]{0}', space=vmem, size = 0x1000, scoped, tag = 'output window, operand 0, single buffered']
    %12 = vsyncpa [#allocation3], 0
    %13 = vsyncpa [#allocation6], 0
    %14 = vsyncpa [#allocation4], 0
    // Predicated region
    $region2: #{tpu_custom_call.1} parent=1 // pred_check
      _
    $region3: #{tpu_custom_call.1} parent=1 // pred_check_branch
      %16 = sbr.rel (0) target = $region5
    $region4: #{tpu_custom_call.1} parent=1 // pred_region
      %s18 = ssub.s32 1024, 1024
      %19 = vsyncadd [#allocation3], %s18
      %s20 = sshll.u32 [#allocation2], 4
      %s21 = int_to_ptr.vmem [resolvable:$true] %s20
      %26 = dma.hbm_to_vmem [thread:$0]  %s0, 1024, %s21, [#allocation3], 128, 128, 8
    $region5: #{tpu_custom_call.1} parent=1 // pred_fallthru
      _
    // Predicated region
    $region6: #{tpu_custom_call.1} parent=1 // pred_check
      _
    $region7: #{tpu_custom_call.1} parent=1 // pred_check_branch
      %28 = sbr.rel (0) target = $region9
    $region8: #{tpu_custom_call.1} parent=1 // pred_region
      %s30 = ssub.s32 512, 512
      %31 = vsyncadd [#allocation6], %s30
      %s32 = sshll.u32 [#allocation5], 4
      %s33 = int_to_ptr.vmem [resolvable:$true] %s32
      %38 = dma.hbm_to_vmem [thread:$0]  %s1, 512, %s33, [#allocation6], 128, 128, 8
    $region9: #{tpu_custom_call.1} parent=1 // pred_fallthru
      _
    // Predicated region
    $region10: #{tpu_custom_call.1} parent=1 // pred_check
      _
    $region11: #{tpu_custom_call.1} parent=1 // pred_check_branch
      %40 = sbr.rel (0) target = $region13
    $region12: #{tpu_custom_call.1} parent=1 // pred_region
      _
    $region13: #{tpu_custom_call.1} parent=1 // pred_fallthru
      _
    // Predicated region
    $region14: #{tpu_custom_call.1} parent=1 // pred_check
      _
    $region15: #{tpu_custom_call.1} parent=1 // pred_check_branch
      %42 = sbr.rel (0) target = $region17
    $region16: #{tpu_custom_call.1} parent=1 // pred_region
      _
    $region17: #{tpu_custom_call.1} parent=1 // pred_fallthru
      _
    // Predicated region
    $region18: #{tpu_custom_call.1} parent=1 // pred_check
      _
    $region19: #{tpu_custom_call.1} parent=1 // pred_check_branch
      %44 = sbr.rel (0) target = $region21
    $region20: #{tpu_custom_call.1} parent=1 // pred_region
      _
    $region21: #{tpu_custom_call.1} parent=1 // pred_fallthru
      _
    // Predicated region
    $region22: #{tpu_custom_call.1} parent=1 // pred_check
      _
    $region23: #{tpu_custom_call.1} parent=1 // pred_check_branch
      %46 = sbr.rel (0) target = $region25
    $region24: #{tpu_custom_call.1} parent=1 // pred_region
      %s48 = ssub.s32 2048, 2048
      %49 = vsyncadd [#allocation6], %s48
      %s50 = sshll.u32 [#allocation7], 4
      %s51 = int_to_ptr.vmem [resolvable:$true] %s50
      %56 = dma.hbm_to_vmem [thread:$0]  %s5, 2048, %s51, [#allocation6], 128, 128, 8
    $region25: #{tpu_custom_call.1} parent=1 // pred_fallthru
      _
    // Predicated region
    $region26: #{tpu_custom_call.1} parent=1 // pred_check
      _
    $region27: #{tpu_custom_call.1} parent=1 // pred_check_branch
      %58 = sbr.rel (0) target = $region29
    $region28: #{tpu_custom_call.1} parent=1 // pred_region
      _
    $region29: #{tpu_custom_call.1} parent=1 // pred_fallthru
      _
    // Predicated region
    $region30: #{tpu_custom_call.1} parent=1 // pred_check
      _
    $region31: #{tpu_custom_call.1} parent=1 // pred_check_branch
      %60 = sbr.rel (0) target = $region33
    $region32: #{tpu_custom_call.1} parent=1 // pred_region
      %61 = dma.done [#allocation3], 1024
    $region33: #{tpu_custom_call.1} parent=1 // pred_fallthru
      _
    // Predicated region
    $region34: #{tpu_custom_call.1} parent=1 // pred_check
      _
    $region35: #{tpu_custom_call.1} parent=1 // pred_check_branch
      %63 = sbr.rel (0) target = $region37
    $region36: #{tpu_custom_call.1} parent=1 // pred_region
      %64 = dma.done [#allocation6], 512
    $region37: #{tpu_custom_call.1} parent=1 // pred_fallthru
      _
    // Predicated region
    $region38: #{tpu_custom_call.1} parent=1 // pred_check
      _
    $region39: #{tpu_custom_call.1} parent=1 // pred_check_branch
      %66 = sbr.rel (0) target = $region41
    $region40: #{tpu_custom_call.1} parent=1 // pred_region
      %67 = dma.done [#allocation6], 2048
    $region41: #{tpu_custom_call.1} parent=1 // pred_fallthru
      _
    %v68 = vld [vmem:[#allocation2] sm:$0xff]
    %v69 = vld [vmem:[#allocation2 + $0x8] sm:$0xff]
    %v70 = vld [vmem:[#allocation2 + $0x10] sm:$0xff]
    %v71 = vld [vmem:[#allocation2 + $0x18] sm:$0xff]
    %v72 = vld [vmem:[#allocation2 + $0x20] sm:$0xff]
    %v73 = vld [vmem:[#allocation2 + $0x28] sm:$0xff]
    %v74 = vld [vmem:[#allocation2 + $0x30] sm:$0xff]
    %v75 = vld [vmem:[#allocation2 + $0x38] sm:$0xff]
    %vm76 = vcmask 261120
    %v77 = vsel %vm76, %v68, 0.0
    %v78 = vrot.slane %v77, 4
    %v79 = vadd.f32 %v77, %v78
    %v80 = vrot.slane %v79, 2
    %v81 = vadd.f32 %v79, %v80
    %v82 = vrot.slane %v81, 1
    %v83 = vadd.f32 %v81, %v82
    %v84 = vsel %vm76, %v69, 0.0
    %v85 = vrot.slane %v84, 4
    %v86 = vadd.f32 %v84, %v85
    %v87 = vrot.slane %v86, 2
    %v88 = vadd.f32 %v86, %v87
    %v89 = vrot.slane %v88, 1
    %v90 = vadd.f32 %v88, %v89
    %v91 = vsel %vm76, %v70, 0.0
    %v92 = vrot.slane %v91, 4
    %v93 = vadd.f32 %v91, %v92
    %v94 = vrot.slane %v93, 2
    %v95 = vadd.f32 %v93, %v94
    %v96 = vrot.slane %v95, 1
    %v97 = vadd.f32 %v95, %v96
    %v98 = vsel %vm76, %v71, 0.0
    %v99 = vrot.slane %v98, 4
    %v100 = vadd.f32 %v98, %v99
    %v101 = vrot.slane %v100, 2
    %v102 = vadd.f32 %v100, %v101
    %v103 = vrot.slane %v102, 1
    %v104 = vadd.f32 %v102, %v103
    %v105 = vsel %vm76, %v72, 0.0
    %v106 = vrot.slane %v105, 4
    %v107 = vadd.f32 %v105, %v106
    %v108 = vrot.slane %v107, 2
    %v109 = vadd.f32 %v107, %v108
    %v110 = vrot.slane %v109, 1
    %v111 = vadd.f32 %v109, %v110
    %v112 = vsel %vm76, %v73, 0.0
    %v113 = vrot.slane %v112, 4
    %v114 = vadd.f32 %v112, %v113
    %v115 = vrot.slane %v114, 2
    %v116 = vadd.f32 %v114, %v115
    %v117 = vrot.slane %v116, 1
    %v118 = vadd.f32 %v116, %v117
    %v119 = vsel %vm76, %v74, 0.0
    %v120 = vrot.slane %v119, 4
    %v121 = vadd.f32 %v119, %v120
    %v122 = vrot.slane %v121, 2
    %v123 = vadd.f32 %v121, %v122
    %v124 = vrot.slane %v123, 1
    %v125 = vadd.f32 %v123, %v124
    %v126 = vsel %vm76, %v75, 0.0
    %v127 = vrot.slane %v126, 4
    %v128 = vadd.f32 %v126, %v127
    %v129 = vrot.slane %v128, 2
    %v130 = vadd.f32 %v128, %v129
    %v131 = vrot.slane %v130, 1
    %v132 = vadd.f32 %v130, %v131
    %v133 = vld [vmem:[#allocation5] sm:$0xff]
    %v134 = vld [vmem:[#allocation5 + $0x8] sm:$0xff]
    %v135 = vld [vmem:[#allocation5 + $0x10] sm:$0xff]
    %v136 = vld [vmem:[#allocation5 + $0x18] sm:$0xff]
    %v137 = vld [vmem:[%s2] sm:$0x1]
    %v139 = vlaneseq
    %v140 = vshrl.u32 %v139, 7
    %v141 = vsub.s32 0, %v140
    %v142 = vrot.slane %v137, %v141
    %vm152 = vcmask 1041409
    %v153 = vsel %vm152, %v90, %v83
    %vm154 = vcmask 1042434
    %v155 = vsel %vm154, %v97, %v153
    %vm156 = vcmask 1043459
    %v157 = vsel %vm156, %v104, %v155
    %vm158 = vcmask 1044484
    %v159 = vsel %vm158, %v111, %v157
    %vm160 = vcmask 1045509
    %v161 = vsel %vm160, %v118, %v159
    %vm162 = vcmask 1046534
    %v163 = vsel %vm162, %v125, %v161
    %vm164 = vcmask 1047559
    %v165 = vsel %vm164, %v132, %v163
    %v166 = vsel %vm76, %v165, 0
    %168 = vmatprep.subr.mxu0 0.0
    %169 = vmatpush1.msra.mxu0 0.0
    %170 = vmatprep.subr.mxu0 0.0
    %171 = vmatpush1.msra.mxu0 0.0
    %172 = vmatprep.subr.mxu0 0.0
    %173 = vmatpush1.msra.mxu0 0.0
    %174 = vmatprep.subr.mxu0 0.0
    %175 = vmatpush1.msra.mxu0 0.0
    %176 = vmatprep.subr.mxu0 0.0
    %177 = vmatpush1.msra.mxu0 0.0
    %178 = vmatprep.subr.mxu0 0.0
    %179 = vmatpush1.msra.mxu0 0.0
    %180 = vmatprep.subr.mxu0 0.0
    %181 = vmatpush1.msra.mxu0 0.0
    %182 = vmatprep.subr.mxu0 0.0
    %183 = vmatpush1.msra.mxu0 0.0
    %184 = vmatprep.subr.mxu0 0.0
    %185 = vmatpush1.msra.mxu0 0.0
    %186 = vmatprep.subr.mxu0 0.0
    %187 = vmatpush1.msra.mxu0 0.0
    %188 = vmatprep.subr.mxu0 0.0
    %189 = vmatpush1.msra.mxu0 0.0
    %190 = vmatprep.subr.mxu0 0.0
    %191 = vmatpush1.msra.mxu0 0.0
    %192 = vmatprep.subr.mxu0 0.0
    %193 = vmatpush1.msra.mxu0 %v136
    %194 = vmatprep.subr.mxu0 0.0
    %195 = vmatpush1.msra.mxu0 %v135
    %196 = vmatprep.subr.mxu0 0.0
    %197 = vmatpush1.msra.mxu0 %v134
    %198 = vmatprep.subr.mxu0 0.0
    %199 = vmatpush1.msra.mxu0 %v133
    %200 = vmatprep.subr.mxu0 0.0
    %201 = vmatpush2.msra.mxu0 0.0
    %202 = vmatprep.subr.mxu0 0.0
    %203 = vmatpush2.msra.mxu0 0.0
    %204 = vmatprep.subr.mxu0 0.0
    %205 = vmatpush2.msra.mxu0 0.0
    %206 = vmatprep.subr.mxu0 0.0
    %207 = vmatpush2.msra.mxu0 0.0
    %208 = vmatprep.subr.mxu0 0.0
    %209 = vmatpush2.msra.mxu0 0.0
    %210 = vmatprep.subr.mxu0 0.0
    %211 = vmatpush2.msra.mxu0 0.0
    %212 = vmatprep.subr.mxu0 0.0
    %213 = vmatpush2.msra.mxu0 0.0
    %214 = vmatprep.subr.mxu0 0.0
    %215 = vmatpush2.msra.mxu0 0.0
    %216 = vmatprep.subr.mxu0 0.0
    %217 = vmatpush2.msra.mxu0 0.0
    %218 = vmatprep.subr.mxu0 0.0
    %219 = vmatpush2.msra.mxu0 0.0
    %220 = vmatprep.subr.mxu0 0.0
    %221 = vmatpush2.msra.mxu0 0.0
    %222 = vmatprep.subr.mxu0 0.0
    %223 = vmatpush2.msra.mxu0 0.0
    %224 = vmatprep.subr.mxu0 0.0
    %225 = vmatpush2.msra.mxu0 0.0
    %226 = vmatprep.subr.mxu0 0.0
    %227 = vmatpush2.msra.mxu0 0.0
    %228 = vmatprep.subr.mxu0 0.0
    %229 = vmatpush2.msra.mxu0 0.0
    %230 = vmatprep.subr.mxu0 0.0
    %231 = vmatpush2.msra.mxu0 0.0
    %232 = vmatprep.mubr.f32.mxu0 0.0
    %233 = vmatmul.mubr.f32.gmra.mxu0 %v166
    %v234 = vpop.f32.mrf.mxu0
    %v235 = vadd.f32 %v142, %v234
    %v236 = vpop.f32.mrf.mxu0
    %237 = vdwg.mxu0
    %v238 = vrot.slane %v235, 4
    %v239 = vadd.f32 %v235, %v238
    %v240 = vrot.slane %v239, 2
    %v241 = vadd.f32 %v239, %v240
    %v242 = vrot.slane %v241, 1
    %v243 = vadd.f32 %v241, %v242
    %v244 = vrcp.pop 8.0
    %v245 = vmul.f32 %v243, %v244
    %v246 = vsub.f32 %v235, %v245
    %v247 = vmul.f32 %v246, %v246
    %v248 = vrot.slane %v247, 4
    %v249 = vadd.f32 %v247, %v248
    %v250 = vrot.slane %v249, 2
    %v251 = vadd.f32 %v249, %v250
    %v252 = vrot.slane %v251, 1
    %v253 = vadd.f32 %v251, %v252
    %v254 = vmul.f32 %v253, %v244
    %v255 = vadd.f32 %v254, 1e-05
    %v256 = vrsqrt.pop %v255
    %v257 = vmul.f32 %v246, %v256
    %v258 = vld [vmem:[%s3] sm:$0x1]
    %v260 = vlaneseq
    %v261 = vshrl.u32 %v260, 7
    %v262 = vsub.s32 0, %v261
    %v263 = vrot.slane %v258, %v262
    %v265 = vmul.f32 %v257, %v263
    %v266 = vld [vmem:[%s4] sm:$0x1]
    %v268 = vlaneseq
    %v269 = vshrl.u32 %v268, 7
    %v270 = vsub.s32 0, %v269
    %v271 = vrot.slane %v266, %v270
    %v273 = vadd.f32 %v265, %v271
    %v274 = vmax.f32 %v273, 0.0
    %v275 = vld [vmem:[#allocation7] sm:$0xff]
    %v276 = vld [vmem:[#allocation7 + $0x8] sm:$0xff]
    %v277 = vld [vmem:[#allocation7 + $0x10] sm:$0xff]
    %v278 = vld [vmem:[#allocation7 + $0x18] sm:$0xff]
    %v279 = vld [vmem:[#allocation7 + $0x20] sm:$0xff]
    %v280 = vld [vmem:[#allocation7 + $0x28] sm:$0xff]
    %v281 = vld [vmem:[#allocation7 + $0x30] sm:$0xff]
    %v282 = vld [vmem:[#allocation7 + $0x38] sm:$0xff]
    %v283 = vld [vmem:[#allocation7 + $0x40] sm:$0xff]
    %v284 = vld [vmem:[#allocation7 + $0x48] sm:$0xff]
    %v285 = vld [vmem:[#allocation7 + $0x50] sm:$0xff]
    %v286 = vld [vmem:[#allocation7 + $0x58] sm:$0xff]
    %v287 = vld [vmem:[#allocation7 + $0x60] sm:$0xff]
    %v288 = vld [vmem:[#allocation7 + $0x68] sm:$0xff]
    %v289 = vld [vmem:[#allocation7 + $0x70] sm:$0xff]
    %v290 = vld [vmem:[#allocation7 + $0x78] sm:$0xff]
    %v291 = vld [vmem:[%s6] sm:$0x1]
    %v293 = vlaneseq
    %v294 = vshrl.u32 %v293, 7
    %v295 = vsub.s32 0, %v294
    %v296 = vrot.slane %v291, %v295
    %298 = vmatprep.subr.mxu0 0.0
    %299 = vmatpush1.msra.mxu0 %v290
    %300 = vmatprep.subr.mxu0 0.0
    %301 = vmatpush1.msra.mxu0 %v289
    %302 = vmatprep.subr.mxu0 0.0
    %303 = vmatpush1.msra.mxu0 %v288
    %304 = vmatprep.subr.mxu0 0.0
    %305 = vmatpush1.msra.mxu0 %v287
    %306 = vmatprep.subr.mxu0 0.0
    %307 = vmatpush1.msra.mxu0 %v286
    %308 = vmatprep.subr.mxu0 0.0
    %309 = vmatpush1.msra.mxu0 %v285
    %310 = vmatprep.subr.mxu0 0.0
    %311 = vmatpush1.msra.mxu0 %v284
    %312 = vmatprep.subr.mxu0 0.0
    %313 = vmatpush1.msra.mxu0 %v283
    %314 = vmatprep.subr.mxu0 0.0
    %315 = vmatpush1.msra.mxu0 %v282
    %316 = vmatprep.subr.mxu0 0.0
    %317 = vmatpush1.msra.mxu0 %v281
    %318 = vmatprep.subr.mxu0 0.0
    %319 = vmatpush1.msra.mxu0 %v280
    %320 = vmatprep.subr.mxu0 0.0
    %321 = vmatpush1.msra.mxu0 %v279
    %322 = vmatprep.subr.mxu0 0.0
    %323 = vmatpush1.msra.mxu0 %v278
    %324 = vmatprep.subr.mxu0 0.0
    %325 = vmatpush1.msra.mxu0 %v277
    %326 = vmatprep.subr.mxu0 0.0
    %327 = vmatpush1.msra.mxu0 %v276
    %328 = vmatprep.subr.mxu0 0.0
    %329 = vmatpush1.msra.mxu0 %v275
    %330 = vmatprep.subr.mxu0 0.0
    %331 = vmatpush2.msra.mxu0 0.0
    %332 = vmatprep.subr.mxu0 0.0
    %333 = vmatpush2.msra.mxu0 0.0
    %334 = vmatprep.subr.mxu0 0.0
    %335 = vmatpush2.msra.mxu0 0.0
    %336 = vmatprep.subr.mxu0 0.0
    %337 = vmatpush2.msra.mxu0 0.0
    %338 = vmatprep.subr.mxu0 0.0
    %339 = vmatpush2.msra.mxu0 0.0
    %340 = vmatprep.subr.mxu0 0.0
    %341 = vmatpush2.msra.mxu0 0.0
    %342 = vmatprep.subr.mxu0 0.0
    %343 = vmatpush2.msra.mxu0 0.0
    %344 = vmatprep.subr.mxu0 0.0
    %345 = vmatpush2.msra.mxu0 0.0
    %346 = vmatprep.subr.mxu0 0.0
    %347 = vmatpush2.msra.mxu0 0.0
    %348 = vmatprep.subr.mxu0 0.0
    %349 = vmatpush2.msra.mxu0 0.0
    %350 = vmatprep.subr.mxu0 0.0
    %351 = vmatpush2.msra.mxu0 0.0
    %352 = vmatprep.subr.mxu0 0.0
    %353 = vmatpush2.msra.mxu0 0.0
    %354 = vmatprep.subr.mxu0 0.0
    %355 = vmatpush2.msra.mxu0 0.0
    %356 = vmatprep.subr.mxu0 0.0
    %357 = vmatpush2.msra.mxu0 0.0
    %358 = vmatprep.subr.mxu0 0.0
    %359 = vmatpush2.msra.mxu0 0.0
    %360 = vmatprep.subr.mxu0 0.0
    %361 = vmatpush2.msra.mxu0 0.0
    %362 = vmatprep.mubr.f32.mxu0 0.0
    %363 = vmatmul.mubr.f32.gmra.mxu0 %v274
    %v364 = vpop.f32.mrf.mxu0
    %v365 = vadd.f32 %v296, %v364
    %v366 = vpop.f32.mrf.mxu0
    %367 = vdwg.mxu0
    %368 = vst [vmem:[#allocation8] sm:$0xff] %v365
    // Predicated region
    $region42: #{tpu_custom_call.1} parent=1 // pred_check
      _
    $region43: #{tpu_custom_call.1} parent=1 // pred_check_branch
      %370 = sbr.rel (0) target = $region45
    $region44: #{tpu_custom_call.1} parent=1 // pred_region
      %s372 = ssub.s32 128, 128
      %373 = vsyncadd [#allocation4], %s372
      %s375 = sshll.u32 [#allocation8], 4
      %s376 = int_to_ptr.vmem [resolvable:$true] %s375
      %378 = dma.vmem_to_hbm [thread:$0]  %s376, 128, %s7, [#allocation4]
    $region45: #{tpu_custom_call.1} parent=1 // pred_fallthru
      _
    // Predicated region
    $region46: #{tpu_custom_call.1} parent=1 // pred_check
      _
    $region47: #{tpu_custom_call.1} parent=1 // pred_check_branch
      %380 = sbr.rel (0) target = $region49
    $region48: #{tpu_custom_call.1} parent=1 // pred_region
      %381 = dma.done [#allocation4], 128
    $region49: #{tpu_custom_call.1} parent=1 // pred_fallthru
      _
    %382 = vsyncpa [#allocation3], 1
    %383 = vsyncpa [#allocation6], 1
    %384 = vsyncpa [#allocation4], 1

</llo_original>
